<compile_context>
chip_gen: v6e
topology: v6e:2x2x1
jax: 0.10.0
libtpu: 0.0.40
codegen_flags: <defaults>
</compile_context>

<pallas_src>
import functools
import math

import jax
import jax.numpy as jnp
from jax.experimental import pallas as pl
from jax.experimental.pallas import tpu as pltpu


# ---------------------------------------------------------------------------
# Positional-encoding table.  Mirrors PositionalEncoding.__init__ EXACTLY: the
# reference module uses *positive* exponents (position * 10000^(i/d)) and a
# separate div term for the odd channels (this is intentional, not the
# canonical exp(-log(10000)*2i/d) form).
# ---------------------------------------------------------------------------
def make_positional_encoding(embed_dim, max_len=5000):
    position = jnp.arange(max_len, dtype=jnp.float32)[:, None]
    div_even = jnp.power(
        10000.0, jnp.arange(0, embed_dim, 2, dtype=jnp.float32) / embed_dim)
    div_odd = jnp.power(
        10000.0, jnp.arange(1, embed_dim, 2, dtype=jnp.float32) / embed_dim)
    pe = jnp.zeros((max_len, embed_dim), jnp.float32)
    pe = pe.at[:, 0::2].set(jnp.sin(position * div_even))
    pe = pe.at[:, 1::2].set(jnp.cos(position * div_odd))
    return pe


# ---------------------------------------------------------------------------
# Shared epilogue: out = scale2 * emb + pe, stored either as a lane-dense flat
# (Bb, TS*D) slab (full-lane stores when D < 128) or as a (Bb, TS, D) block.
# emb_rows is row-form (Bb*TS, D), rows ordered b-major then t.
# ---------------------------------------------------------------------------
def _finalize_and_store(out_ref, emb_rows, pe_tile, *, scale2, batch_tile,
                        flat_out):
    ts, d = pe_tile.shape
    scaled = scale2 * emb_rows
    if flat_out:
        pe_rows = jnp.tile(pe_tile, (batch_tile, 1))               # (Bb*TS, D)
        res = scaled + pe_rows
        out_ref[...] = res.reshape(batch_tile, ts * d).astype(out_ref.dtype)
    else:
        for b in range(batch_tile):                                # static unroll
            blk = scaled[b * ts:(b + 1) * ts, :] + pe_tile
            out_ref[b] = blk.astype(out_ref.dtype)


# ---------------------------------------------------------------------------
# Path A: VMEM-resident LUT, one-hot @ LUT matmul gather on the MXU.
# ---------------------------------------------------------------------------
def _embed_resident_kernel(ids_ref, lut_ref, pe_ref, out_ref, *,
                           scale2, batch_tile, flat_out):
    # ids_ref: (1, Bb*TS, 1) int32 ; lut_ref: (Vp, D) f32 (resident, 1-buffered)
    # pe_ref : (TS, D) f32         ; out_ref: (Bb, TS*D) or (Bb, TS, D)
    rows = ids_ref.shape[1]
    vp = lut_ref.shape[0]
    ids = ids_ref[0]                                               # (rows, 1)
    iota = jax.lax.broadcasted_iota(jnp.int32, (rows, vp), 1)
    onehot = (ids == iota).astype(jnp.float32)                     # (rows, Vp)
    # Row gather via MXU: exact since each one-hot row has a single 1.0.
    emb = jnp.dot(onehot, lut_ref[...], preferred_element_type=jnp.float32)
    _finalize_and_store(out_ref, emb, pe_ref[...],
                        scale2=scale2, batch_tile=batch_tile, flat_out=flat_out)


# ---------------------------------------------------------------------------
# Path B: LUT stays in HBM; ids scalar-prefetched into SMEM; per-row async DMA
# gather into a VMEM buffer.  Pure data movement: scales with rows*D only.
# ---------------------------------------------------------------------------
def _embed_gather_kernel(ids_ref, pe_ref, lut_hbm, out_ref, gbuf, sems, *,
                         scale2, batch_tile, seq_tile, flat_out):
    # ids_ref: (B, S) int32 in SMEM ; lut_hbm: (V, D) in HBM (pl.ANY)
    # pe_ref : (TS, D) f32 VMEM     ; gbuf: (Bb*TS, D) VMEM ; sems: (1,) DMA sem
    s0 = pl.program_id(0) * seq_tile
    b0 = pl.program_id(1) * batch_tile
    rows = batch_tile * seq_tile

    # TODO(synk): overlap with compute across grid steps (prefetch next tile's
    # rows into a second gather buffer) once this shows up as DMA-latency bound.
    @pl.loop(0, rows)
    def _(r):
        b = r // seq_tile
        t = r - b * seq_tile
        vid = ids_ref[b0 + b, s0 + t]
        pltpu.make_async_copy(lut_hbm.at[vid], gbuf.at[r], sems.at[0]).start()

    @pl.loop(0, rows)
    def _(r):
        pltpu.make_async_copy(lut_hbm.at[0], gbuf.at[r], sems.at[0]).wait()

    emb = gbuf[...].astype(jnp.float32)                            # (rows, D)
    _finalize_and_store(out_ref, emb, pe_ref[...],
                        scale2=scale2, batch_tile=batch_tile, flat_out=flat_out)


# ---------------------------------------------------------------------------
# Wrapper helpers.
# ---------------------------------------------------------------------------
def _physical_vmem_bytes():
    try:
        return int(pltpu.get_tpu_info().vmem_capacity_bytes)
    except Exception:
        return 64 * 1024 * 1024        # conservative default (v7x per-core VMEM)


def _vmem_ceiling_bytes():
    # Generation-aware headroom for compiler scratch / pipeline buffers:
    # 128 MiB (v5e/v6e) -> ~107 MiB usable; 64 MiB (v7x per core) -> 48 MiB.
    phys = _physical_vmem_bytes()
    return phys - max(16 * 1024 * 1024, phys // 6)


def _choose_tiles(B, S, D, itemsize=4, target_block_bytes=8 << 20):
    """Largest (batch_tile, seq_tile) under a per-block byte target: fat blocks
    amortize the ~0.35us/grid-step overhead, give the MXU a big M, and keep
    every BlockSpec (8,128)-legal (seq tile is S itself or a multiple of 8)."""
    def block_bytes(bb, ts):
        return bb * ts * D * itemsize

    seq_tile = S
    if block_bytes(B, S) > target_block_bytes:
        div8 = [d for d in range(S, 7, -1) if S % d == 0 and d % 8 == 0]
        fitting = [d for d in div8 if block_bytes(B, d) <= target_block_bytes]
        if fitting:
            seq_tile = fitting[0]
        elif div8:
            seq_tile = div8[-1]
        # else: no sublane-legal divisor; keep the full sequence per block.

    batch_tile = B
    if seq_tile % 8 == 0 and (block_bytes(B, seq_tile) > target_block_bytes
                              or B > 64):
        div8b = [d for d in range(min(B, 64), 7, -1)
                 if B % d == 0 and d % 8 == 0]
        if div8b:
            batch_tile = div8b[0]
    return batch_tile, seq_tile


def _call_resident(ids, lut, pe_s, B, S, D, V, Vp, Bb, TS, nbt, nst, scale2,
                   out_dtype, flat_out, single_buffer_lut, vmem_limit):
    lut_p = lut.astype(jnp.float32)
    if Vp != V:
        lut_p = jnp.pad(lut_p, ((0, Vp - V), (0, 0)))
    # ids as (num_s_tiles, B*TS, 1): row r = b*TS + t (b-major) inside a tile.
    ids_r = jnp.transpose(ids.reshape(B, nst, TS), (1, 0, 2)).reshape(
        nst, B * TS, 1)

    if flat_out:
        out_shape = jax.ShapeDtypeStruct((B, S * D), out_dtype)
        out_spec = pl.BlockSpec((Bb, TS * D), lambda s, b: (b, s))
    else:
        out_shape = jax.ShapeDtypeStruct((B, S, D), out_dtype)
        out_spec = pl.BlockSpec((Bb, TS, D), lambda s, b: (b, s, 0))

    lut_kwargs = {}
    if single_buffer_lut:
        # Grid-invariant block: a second pipeline buffer would just duplicate
        # the whole LUT in VMEM for zero benefit.
        lut_kwargs["pipeline_mode"] = pl.Buffered(1)
    lut_spec = pl.BlockSpec((Vp, D), lambda s, b: (0, 0), **lut_kwargs)

    out_isz = jnp.dtype(out_dtype).itemsize
    flops = 2 * B * S * Vp * D + 2 * B * S * D
    bytes_accessed = (B * S * 4 + Vp * D * 4 + S * D * 4 + B * S * D * out_isz)

    out = pl.pallas_call(
        functools.partial(_embed_resident_kernel, scale2=scale2,
                          batch_tile=Bb, flat_out=flat_out),
        # Seq-tile axis outer (batch inner) so each PE block is fetched once
        # per seq tile; both axes independent -> "parallel" for v7x megacore.
        grid=(nst, nbt),
        in_specs=[
            pl.BlockSpec((1, Bb * TS, 1), lambda s, b: (s, b, 0)),
            lut_spec,
            pl.BlockSpec((TS, D), lambda s, b: (s, 0)),
        ],
        out_specs=out_spec,
        out_shape=out_shape,
        compiler_params=pltpu.CompilerParams(
            dimension_semantics=("parallel", "parallel"),
            vmem_limit_bytes=int(vmem_limit)),
        cost_estimate=pl.CostEstimate(flops=flops, transcendentals=0,
                                      bytes_accessed=bytes_accessed),
    )(ids_r, lut_p, pe_s)
    return out.reshape(B, S, D)


def _call_gather(ids, lut, pe_s, B, S, D, Bb, TS, nbt, nst, scale2,
                 out_dtype, flat_out, vmem_limit):
    rows = Bb * TS
    if flat_out:
        out_shape = jax.ShapeDtypeStruct((B, S * D), out_dtype)
        out_spec = pl.BlockSpec((Bb, TS * D), lambda s, b, ids_ref: (b, s))
    else:
        out_shape = jax.ShapeDtypeStruct((B, S, D), out_dtype)
        out_spec = pl.BlockSpec((Bb, TS, D), lambda s, b, ids_ref: (b, s, 0))

    out_isz = jnp.dtype(out_dtype).itemsize
    flops = 2 * B * S * D
    bytes_accessed = (B * S * 4 + B * S * D * lut.dtype.itemsize + S * D * 4
                      + B * S * D * out_isz)

    grid_spec = pltpu.PrefetchScalarGridSpec(
        num_scalar_prefetch=1,                     # ids -> SMEM
        grid=(nst, nbt),
        in_specs=[
            pl.BlockSpec((TS, D), lambda s, b, ids_ref: (s, 0)),
            pl.BlockSpec(memory_space=pl.ANY),     # LUT stays in HBM
        ],
        out_specs=out_spec,
        scratch_shapes=[
            pltpu.VMEM((rows, D), lut.dtype),      # gather buffer
            pltpu.SemaphoreType.DMA((1,)),         # shared: N starts / N waits
        ],
    )

    out = pl.pallas_call(
        functools.partial(_embed_gather_kernel, scale2=scale2, batch_tile=Bb,
                          seq_tile=TS, flat_out=flat_out),
        grid_spec=grid_spec,
        out_shape=out_shape,
        compiler_params=pltpu.CompilerParams(
            dimension_semantics=("parallel", "parallel"),
            vmem_limit_bytes=int(vmem_limit)),
        cost_estimate=pl.CostEstimate(flops=flops, transcendentals=0,
                                      bytes_accessed=bytes_accessed),
    )(ids, pe_s, lut)
    return out.reshape(B, S, D)


def embeddings_forward(x, lut, pe, embed_dim, *, out_dtype=jnp.float32,
                       force_path=None):
    """x: [B, S] int ids; lut: [V, D] float; pe: [>=S, D] float -> [B, S, D]."""
    B, S = x.shape
    V, D = lut.shape
    assert D == embed_dim
    assert pe.shape[0] >= S, "sequence longer than positional-encoding table"

    out_isz = jnp.dtype(out_dtype).itemsize
    Bb, TS = _choose_tiles(B, S, D, itemsize=max(4, out_isz))
    nbt, nst = B // Bb, S // TS

    # nn.Embedding would raise on out-of-range ids; clamp so the row DMA /
    # one-hot stays in bounds (behaviour is undefined either way for bad ids).
    ids = jnp.clip(x.astype(jnp.int32), 0, V - 1)
    pe_s = pe[:S].astype(jnp.float32)
    scale2 = 2.0 * math.sqrt(embed_dim)   # the embedding is added twice

    vmem_ceiling = _vmem_ceiling_bytes()
    Vp = ((V + 127) // 128) * 128         # lane-align the one-hot contraction
    rows = Bb * TS

    resident_need = (
        Vp * D * 4                        # LUT, single-buffered
        + 2 * rows * Vp * 4               # one-hot + iota temporaries
        + 2 * TS * D * 4                  # PE blocks (double-buffered)
        + 2 * rows * D * out_isz          # output blocks
        + 2 * rows * 4                    # id blocks
        + (2 << 20))                      # margin
    gather_need = (rows * D * lut.dtype.itemsize + 2 * TS * D * 4
                   + 2 * rows * D * out_isz + (2 << 20))

    # One-hot construction costs O(rows*Vp) VALU ops -> gather for real vocabs
    # (and whenever the resident footprint would not fit this chip's VMEM).
    use_gather = (force_path == "gather") or (
        force_path != "resident"
        and (Vp > 2048 or resident_need > vmem_ceiling))

    flat_ok = (D % 128 != 0) and ((TS * D) % 128 == 0)

    def run(flat_out, single_buffer_lut):
        if use_gather:
            return _call_gather(
                ids, lut, pe_s, B, S, D, Bb, TS, nbt, nst, scale2, out_dtype,
                flat_out, min(vmem_ceiling, max(32 << 20, 2 * gather_need)))
        return _call_resident(
            ids, lut, pe_s, B, S, D, V, Vp, Bb, TS, nbt, nst, scale2,
            out_dtype, flat_out, single_buffer_lut,
            min(vmem_ceiling, max(32 << 20, 2 * resident_need)))

    # Preferred config first; fall back if Mosaic rejects the lane-flattening
    # reshape or single-buffered pipeline mode on this JAX/libtpu version.
    configs = []
    for cfg in ((flat_ok, True), (False, True), (False, False)):
        if cfg not in configs:
            configs.append(cfg)
    last_err = None
    for flat_out, single_buffer_lut in configs:
        try:
            return run(flat_out, single_buffer_lut)
        except Exception as e:  # noqa: BLE001 - fall back to the safer layout
            last_err = e
    raise last_err


if __name__ == "__main__":
    # Small shapes consistent with the module: batch=2, seq=8, vocab=11, D=32.
    B, S, V, D = 2, 8, 11, 32

    key = jax.random.PRNGKey(0)
    k_lut, k_x = jax.random.split(key)
    lut = jax.random.normal(k_lut, (V, D), dtype=jnp.float32)  # nn.Embedding ~N(0,1)
    x = jax.random.randint(k_x, (B, S), 0, V, dtype=jnp.int32)
    pe = make_positional_encoding(D, max_len=5000)

    # Pure-JAX reference of the exact module semantics.
    embed_ref = lut[x] * math.sqrt(D)                  # [B, S, D]
    ref = embed_ref + (embed_ref + pe[None, :S, :])    # embed + pos_encode(embed)

    # Auto path (small vocab -> VMEM-resident LUT + one-hot MXU lookup).
    out_res = jax.block_until_ready(embeddings_forward(x, lut, pe, D))
    # Forced HBM row-gather path (what large vocabs use) on the same inputs.
    out_gat = jax.block_until_ready(
        embeddings_forward(x, lut, pe, D, force_path="gather"))

    assert out_res.shape == (B, S, D) and out_gat.shape == (B, S, D)
    assert jnp.allclose(out_res, ref, atol=1e-5, rtol=1e-5), "resident mismatch"
    assert jnp.allclose(out_gat, ref, atol=1e-5, rtol=1e-5), "gather mismatch"

    print("KERNEL_OK")
</pallas_src>

<mosaic_0001>
module attributes {stable_mosaic.version = 11 : i64} {
  func.func @_embed_resident_kernel(%arg0: i32, %arg1: i32, %arg2: memref<1x16x1xi32, #tpu.memory_space<vmem>>, %arg3: memref<128x32xf32, #tpu.memory_space<vmem>>, %arg4: memref<8x32xf32, #tpu.memory_space<vmem>>, %arg5: memref<2x256xf32, #tpu.memory_space<vmem>>) attributes {dimension_semantics = [#tpu.dimension_semantics<parallel>, #tpu.dimension_semantics<parallel>], iteration_bounds = array<i64: 1, 1>, scalar_prefetch = 0 : i64, scratch_operands = 0 : i64, tpu.core_type = #tpu.core_type<tc>, window_params = [{transform_indices = @transform_0, window_bounds = array<i64: 1, 16, 1>}, {pipeline_mode = #tpu.pipeline_mode<synchronous>, transform_indices = @transform_1, window_bounds = array<i64: 128, 32>}, {transform_indices = @transform_2, window_bounds = array<i64: 8, 32>}, {transform_indices = @transform_3, window_bounds = array<i64: 2, 256>}]} {
    %c0 = arith.constant 0 : index
    %c0_0 = arith.constant 0 : index
    %c0_1 = arith.constant 0 : index
    %0 = vector.load %arg2[%c0, %c0_0, %c0_1] : memref<1x16x1xi32, #tpu.memory_space<vmem>>, vector<1x16x1xi32>
    %1 = vector.shape_cast %0 : vector<1x16x1xi32> to vector<16x1xi32>
    %2 = tpu.iota {dimensions = array<i32: 1>} : vector<16x128xi32>
    %3 = vector.broadcast %1 : vector<16x1xi32> to vector<16x128xi32>
    %4 = arith.cmpi eq, %3, %2 : vector<16x128xi32>
    %5 = arith.extui %4 : vector<16x128xi1> to vector<16x128xi32>
    %6 = arith.sitofp %5 : vector<16x128xi32> to vector<16x128xf32>
    %c0_2 = arith.constant 0 : index
    %c0_3 = arith.constant 0 : index
    %7 = vector.load %arg3[%c0_2, %c0_3] : memref<128x32xf32, #tpu.memory_space<vmem>>, vector<128x32xf32>
    %cst = arith.constant dense<0.000000e+00> : vector<16x32xf32>
    %8 = tpu.matmul %6, %7, %cst {dimension_numbers = #tpu.dot_dimension_numbers<[1], [0], [0], [1], [0, 0, 1, 1], [], []>} : vector<16x128xf32>, vector<128x32xf32>, vector<16x32xf32> -> vector<16x32xf32>
    %c0_4 = arith.constant 0 : index
    %c0_5 = arith.constant 0 : index
    %9 = vector.load %arg4[%c0_4, %c0_5] : memref<8x32xf32, #tpu.memory_space<vmem>>, vector<8x32xf32>
    %cst_6 = arith.constant 11.3137083 : f32
    %10 = vector.broadcast %cst_6 : f32 to vector<16x32xf32>
    %11 = arith.mulf %10, %8 : vector<16x32xf32>
    %12 = tpu.concatenate %9, %9 in 0 : vector<8x32xf32>, vector<8x32xf32> -> vector<16x32xf32>
    %13 = arith.addf %11, %12 : vector<16x32xf32>
    %14 = vector.shape_cast %13 : vector<16x32xf32> to vector<2x256xf32>
    %c0_7 = arith.constant 0 : index
    %c0_8 = arith.constant 0 : index
    %15 = vector.load %arg5[%c0_7, %c0_8] : memref<2x256xf32, #tpu.memory_space<vmem>>, vector<2x256xf32>
    tpu.vector_store %arg5[%c0_7, %c0_8], %14 {strides = array<i32>} : memref<2x256xf32, #tpu.memory_space<vmem>>, vector<2x256xf32>,
    return
  }
  func.func @transform_0(%arg0: i32, %arg1: i32) -> (i32, i32, i32) {
    %c0_i32 = arith.constant 0 : i32
    %c0_i32_0 = arith.constant 0 : i32
    return %arg0, %arg1, %c0_i32 : i32, i32, i32
  }
  func.func @transform_1(%arg0: i32, %arg1: i32) -> (i32, i32) {
    %c0_i32 = arith.constant 0 : i32
    %c0_i32_0 = arith.constant 0 : i32
    %c0_i32_1 = arith.constant 0 : i32
    return %c0_i32, %c0_i32_0 : i32, i32
  }
  func.func @transform_2(%arg0: i32, %arg1: i32) -> (i32, i32) {
    %c0_i32 = arith.constant 0 : i32
    %c0_i32_0 = arith.constant 0 : i32
    return %arg0, %c0_i32 : i32, i32
  }
  func.func @transform_3(%arg0: i32, %arg1: i32) -> (i32, i32) {
    %c0_i32 = arith.constant 0 : i32
    return %arg1, %arg0 : i32, i32
  }
}

module attributes {stable_mosaic.version = 11 : i64} {
  func.func @_embed_resident_kernel(%arg0: i32, %arg1: i32, %arg2: memref<1x16x1xi32, #tpu.memory_space<vmem>>, %arg3: memref<128x32xf32, #tpu.memory_space<vmem>>, %arg4: memref<8x32xf32, #tpu.memory_space<vmem>>, %arg5: memref<2x8x32xf32, #tpu.memory_space<vmem>>) attributes {dimension_semantics = [#tpu.dimension_semantics<parallel>, #tpu.dimension_semantics<parallel>], iteration_bounds = array<i64: 1, 1>, scalar_prefetch = 0 : i64, scratch_operands = 0 : i64, tpu.core_type = #tpu.core_type<tc>, window_params = [{transform_indices = @transform_0, window_bounds = array<i64: 1, 16, 1>}, {pipeline_mode = #tpu.pipeline_mode<synchronous>, transform_indices = @transform_1, window_bounds = array<i64: 128, 32>}, {transform_indices = @transform_2, window_bounds = array<i64: 8, 32>}, {transform_indices = @transform_3, window_bounds = array<i64: 2, 8, 32>}]} {
    %c0 = arith.constant 0 : index
    %c0_0 = arith.constant 0 : index
    %c0_1 = arith.constant 0 : index
    %0 = vector.load %arg2[%c0, %c0_0, %c0_1] : memref<1x16x1xi32, #tpu.memory_space<vmem>>, vector<1x16x1xi32>
    %1 = vector.shape_cast %0 : vector<1x16x1xi32> to vector<16x1xi32>
    %2 = tpu.iota {dimensions = array<i32: 1>} : vector<16x128xi32>
    %3 = vector.broadcast %1 : vector<16x1xi32> to vector<16x128xi32>
    %4 = arith.cmpi eq, %3, %2 : vector<16x128xi32>
    %5 = arith.extui %4 : vector<16x128xi1> to vector<16x128xi32>
    %6 = arith.sitofp %5 : vector<16x128xi32> to vector<16x128xf32>
    %c0_2 = arith.constant 0 : index
    %c0_3 = arith.constant 0 : index
    %7 = vector.load %arg3[%c0_2, %c0_3] : memref<128x32xf32, #tpu.memory_space<vmem>>, vector<128x32xf32>
    %cst = arith.constant dense<0.000000e+00> : vector<16x32xf32>
    %8 = tpu.matmul %6, %7, %cst {dimension_numbers = #tpu.dot_dimension_numbers<[1], [0], [0], [1], [0, 0, 1, 1], [], []>} : vector<16x128xf32>, vector<128x32xf32>, vector<16x32xf32> -> vector<16x32xf32>
    %c0_4 = arith.constant 0 : index
    %c0_5 = arith.constant 0 : index
    %9 = vector.load %arg4[%c0_4, %c0_5] : memref<8x32xf32, #tpu.memory_space<vmem>>, vector<8x32xf32>
    %cst_6 = arith.constant 11.3137083 : f32
    %10 = vector.broadcast %cst_6 : f32 to vector<16x32xf32>
    %11 = arith.mulf %10, %8 : vector<16x32xf32>
    %12 = vector.extract_strided_slice %11 {offsets = [0, 0], sizes = [8, 32], strides = [1, 1]} : vector<16x32xf32> to vector<8x32xf32>
    %13 = arith.addf %12, %9 : vector<8x32xf32>
    %c0_7 = arith.constant 0 : index
    %c0_8 = arith.constant 0 : index
    %c0_9 = arith.constant 0 : index
    %14 = vector.load %arg5[%c0_7, %c0_8, %c0_9] : memref<2x8x32xf32, #tpu.memory_space<vmem>>, vector<1x8x32xf32>
    %15 = vector.shape_cast %14 : vector<1x8x32xf32> to vector<8x32xf32>
    %16 = vector.shape_cast %13 : vector<8x32xf32> to vector<1x8x32xf32>
    tpu.vector_store %arg5[%c0_7, %c0_8, %c0_9], %16 {strides = array<i32>} : memref<2x8x32xf32, #tpu.memory_space<vmem>>, vector<1x8x32xf32>,
    %17 = vector.extract_strided_slice %11 {offsets = [8, 0], sizes = [8, 32], strides = [1, 1]} : vector<16x32xf32> to vector<8x32xf32>
    %18 = arith.addf %17, %9 : vector<8x32xf32>
    %c1 = arith.constant 1 : index
    %c0_10 = arith.constant 0 : index
    %c0_11 = arith.constant 0 : index
    %19 = vector.load %arg5[%c1, %c0_10, %c0_11] : memref<2x8x32xf32, #tpu.memory_space<vmem>>, vector<1x8x32xf32>
    %20 = vector.shape_cast %19 : vector<1x8x32xf32> to vector<8x32xf32>
    %21 = vector.shape_cast %18 : vector<8x32xf32> to vector<1x8x32xf32>
    tpu.vector_store %arg5[%c1, %c0_10, %c0_11], %21 {strides = array<i32>} : memref<2x8x32xf32, #tpu.memory_space<vmem>>, vector<1x8x32xf32>,
    return
  }
  func.func @transform_0(%arg0: i32, %arg1: i32) -> (i32, i32, i32) {
    %c0_i32 = arith.constant 0 : i32
    %c0_i32_0 = arith.constant 0 : i32
    return %arg0, %arg1, %c0_i32 : i32, i32, i32
  }
  func.func @transform_1(%arg0: i32, %arg1: i32) -> (i32, i32) {
    %c0_i32 = arith.constant 0 : i32
    %c0_i32_0 = arith.constant 0 : i32
    %c0_i32_1 = arith.constant 0 : i32
    return %c0_i32, %c0_i32_0 : i32, i32
  }
  func.func @transform_2(%arg0: i32, %arg1: i32) -> (i32, i32) {
    %c0_i32 = arith.constant 0 : i32
    %c0_i32_0 = arith.constant 0 : i32
    return %arg0, %c0_i32 : i32, i32
  }
  func.func @transform_3(%arg0: i32, %arg1: i32) -> (i32, i32, i32) {
    %c0_i32 = arith.constant 0 : i32
    %c0_i32_0 = arith.constant 0 : i32
    return %arg1, %arg0, %c0_i32 : i32, i32, i32
  }
}

module attributes {stable_mosaic.version = 11 : i64} {
  func.func @_embed_resident_kernel(%arg0: i32, %arg1: i32, %arg2: memref<1x16x1xi32, #tpu.memory_space<vmem>>, %arg3: memref<128x32xf32, #tpu.memory_space<vmem>>, %arg4: memref<8x32xf32, #tpu.memory_space<vmem>>, %arg5: memref<2x8x32xf32, #tpu.memory_space<vmem>>) attributes {dimension_semantics = [#tpu.dimension_semantics<parallel>, #tpu.dimension_semantics<parallel>], iteration_bounds = array<i64: 1, 1>, scalar_prefetch = 0 : i64, scratch_operands = 0 : i64, tpu.core_type = #tpu.core_type<tc>, window_params = [{transform_indices = @transform_0, window_bounds = array<i64: 1, 16, 1>}, {pipeline_mode = #tpu.pipeline_mode<synchronous>, transform_indices = @transform_1, window_bounds = array<i64: 128, 32>}, {transform_indices = @transform_2, window_bounds = array<i64: 8, 32>}, {transform_indices = @transform_3, window_bounds = array<i64: 2, 8, 32>}]} {
    %c0 = arith.constant 0 : index
    %c0_0 = arith.constant 0 : index
    %c0_1 = arith.constant 0 : index
    %0 = vector.load %arg2[%c0, %c0_0, %c0_1] : memref<1x16x1xi32, #tpu.memory_space<vmem>>, vector<1x16x1xi32>
    %1 = vector.shape_cast %0 : vector<1x16x1xi32> to vector<16x1xi32>
    %2 = tpu.iota {dimensions = array<i32: 1>} : vector<16x128xi32>
    %3 = vector.broadcast %1 : vector<16x1xi32> to vector<16x128xi32>
    %4 = arith.cmpi eq, %3, %2 : vector<16x128xi32>
    %5 = arith.extui %4 : vector<16x128xi1> to vector<16x128xi32>
    %6 = arith.sitofp %5 : vector<16x128xi32> to vector<16x128xf32>
    %c0_2 = arith.constant 0 : index
    %c0_3 = arith.constant 0 : index
    %7 = vector.load %arg3[%c0_2, %c0_3] : memref<128x32xf32, #tpu.memory_space<vmem>>, vector<128x32xf32>
    %cst = arith.constant dense<0.000000e+00> : vector<16x32xf32>
    %8 = tpu.matmul %6, %7, %cst {dimension_numbers = #tpu.dot_dimension_numbers<[1], [0], [0], [1], [0, 0, 1, 1], [], []>} : vector<16x128xf32>, vector<128x32xf32>, vector<16x32xf32> -> vector<16x32xf32>
    %c0_4 = arith.constant 0 : index
    %c0_5 = arith.constant 0 : index
    %9 = vector.load %arg4[%c0_4, %c0_5] : memref<8x32xf32, #tpu.memory_space<vmem>>, vector<8x32xf32>
    %cst_6 = arith.constant 11.3137083 : f32
    %10 = vector.broadcast %cst_6 : f32 to vector<16x32xf32>
    %11 = arith.mulf %10, %8 : vector<16x32xf32>
    %12 = vector.extract_strided_slice %11 {offsets = [0, 0], sizes = [8, 32], strides = [1, 1]} : vector<16x32xf32> to vector<8x32xf32>
    %13 = arith.addf %12, %9 : vector<8x32xf32>
    %c0_7 = arith.constant 0 : index
    %c0_8 = arith.constant 0 : index
    %c0_9 = arith.constant 0 : index
    %14 = vector.load %arg5[%c0_7, %c0_8, %c0_9] : memref<2x8x32xf32, #tpu.memory_space<vmem>>, vector<1x8x32xf32>
    %15 = vector.shape_cast %14 : vector<1x8x32xf32> to vector<8x32xf32>
    %16 = vector.shape_cast %13 : vector<8x32xf32> to vector<1x8x32xf32>
    tpu.vector_store %arg5[%c0_7, %c0_8, %c0_9], %16 {strides = array<i32>} : memref<2x8x32xf32, #tpu.memory_space<vmem>>, vector<1x8x32xf32>,
    %17 = vector.extract_strided_slice %11 {offsets = [8, 0], sizes = [8, 32], strides = [1, 1]} : vector<16x32xf32> to vector<8x32xf32>
    %18 = arith.addf %17, %9 : vector<8x32xf32>
    %c1 = arith.constant 1 : index
    %c0_10 = arith.constant 0 : index
    %c0_11 = arith.constant 0 : index
    %19 = vector.load %arg5[%c1, %c0_10, %c0_11] : memref<2x8x32xf32, #tpu.memory_space<vmem>>, vector<1x8x32xf32>
    %20 = vector.shape_cast %19 : vector<1x8x32xf32> to vector<8x32xf32>
    %21 = vector.shape_cast %18 : vector<8x32xf32> to vector<1x8x32xf32>
    tpu.vector_store %arg5[%c1, %c0_10, %c0_11], %21 {strides = array<i32>} : memref<2x8x32xf32, #tpu.memory_space<vmem>>, vector<1x8x32xf32>,
    return
  }
  func.func @transform_0(%arg0: i32, %arg1: i32) -> (i32, i32, i32) {
    %c0_i32 = arith.constant 0 : i32
    %c0_i32_0 = arith.constant 0 : i32
    return %arg0, %arg1, %c0_i32 : i32, i32, i32
  }
  func.func @transform_1(%arg0: i32, %arg1: i32) -> (i32, i32) {
    %c0_i32 = arith.constant 0 : i32
    %c0_i32_0 = arith.constant 0 : i32
    %c0_i32_1 = arith.constant 0 : i32
    return %c0_i32, %c0_i32_0 : i32, i32
  }
  func.func @transform_2(%arg0: i32, %arg1: i32) -> (i32, i32) {
    %c0_i32 = arith.constant 0 : i32
    %c0_i32_0 = arith.constant 0 : i32
    return %arg0, %c0_i32 : i32, i32
  }
  func.func @transform_3(%arg0: i32, %arg1: i32) -> (i32, i32, i32) {
    %c0_i32 = arith.constant 0 : i32
    %c0_i32_0 = arith.constant 0 : i32
    return %arg1, %arg0, %c0_i32 : i32, i32, i32
  }
}

</mosaic_0001>

<llo_original>
// kernel: tpu_custom_call.1
$region0: #{tpu_custom_call.1}
  #allocation0 [shape = 'u32[]', space=smem, size = 0x4, offset = 0x4, fixed_abs, tag = 'smem constant byte address 0x4 - core index']
  #allocation1 [shape = 'u32[144,128]{1,0:T(1,128)}', space=vmem, size = 0x12000, scoped, tag = 'internal scratch']
  %s0 = inlined_call_operand.vmem [shape: s32[1,16,1], index: 0, kind: input, shape index: {}]
  %s1 = inlined_call_operand.vmem [shape: f32[128,32], index: 1, kind: input, shape index: {}]
  %s2 = inlined_call_operand.vmem [shape: f32[8,32], index: 2, kind: input, shape index: {}]
  %s3 = inlined_call_operand.hbm [shape: f32[2,8,32], index: 3, kind: output, shape index: {}]
  %s4 = sld [smem:[#allocation0]]
  $region22: #{tpu_custom_call.1} parent=0
    _
  %s6 = ssub.s32 1, %s4
  %s7 = scalar_select 0, %s6, %s4
  $region1: #{tpu_custom_call.1} parent=0
    #allocation2 [shape = 'u8[8192]{0}', space=vmem, size = 0x2000, scoped, tag = 'output window, operand 0, single buffered']
    #allocation3 [shape = 's32[1]{0}', space=sflag, size = 0x4, scoped, tag = 'scoped memory for tpu_custom_call.1']
    %8 = vsyncpa [#allocation3], 0
    // Predicated region
    $region2: #{tpu_custom_call.1} parent=1 // pred_check
      _
    $region3: #{tpu_custom_call.1} parent=1 // pred_check_branch
      %10 = sbr.rel (0) target = $region5
    $region4: #{tpu_custom_call.1} parent=1 // pred_region
      _
    $region5: #{tpu_custom_call.1} parent=1 // pred_fallthru
      _
    // Predicated region
    $region6: #{tpu_custom_call.1} parent=1 // pred_check
      _
    $region7: #{tpu_custom_call.1} parent=1 // pred_check_branch
      %12 = sbr.rel (0) target = $region9
    $region8: #{tpu_custom_call.1} parent=1 // pred_region
      _
    $region9: #{tpu_custom_call.1} parent=1 // pred_fallthru
      _
    // Predicated region
    $region10: #{tpu_custom_call.1} parent=1 // pred_check
      _
    $region11: #{tpu_custom_call.1} parent=1 // pred_check_branch
      %14 = sbr.rel (0) target = $region13
    $region12: #{tpu_custom_call.1} parent=1 // pred_region
      _
    $region13: #{tpu_custom_call.1} parent=1 // pred_fallthru
      _
    %v15 = vld [vmem:[%s0] sm:$0xff]
    %v16 = vld [vmem:[%s0 + $0x8] sm:$0xff]
    %v17 = vlaneseq
    %v18 = vand.u32 %v17, 127
    %19 = vset.pattern.permute.xlu0 0
    %20 = vperm.xlu0 %19, %v15
    %v21 = vpop.permute.xlu0 %20
    %22 = vset.pattern.permute.xlu0 0
    %23 = vperm.xlu0 %22, %v16
    %v24 = vpop.permute.xlu0 %23
    %vm25 = vcmp.eq.s32.totalorder %v21, %v18
    %vm26 = vcmp.eq.s32.totalorder %v24, %v18
    %v27 = vsel %vm25, 1, 0
    %v28 = vsel %vm26, 1, 0
    %v29 = vcvt.s32.f32 %v27
    %v30 = vcvt.s32.f32 %v28
    %v31 = vld [vmem:[%s1] sm:$0xff]
    %v32 = vld [vmem:[%s1 + $0x8] sm:$0xff]
    %v33 = vld [vmem:[%s1 + $0x10] sm:$0xff]
    %v34 = vld [vmem:[%s1 + $0x18] sm:$0xff]
    %v35 = vld [vmem:[%s1 + $0x20] sm:$0xff]
    %v36 = vld [vmem:[%s1 + $0x28] sm:$0xff]
    %v37 = vld [vmem:[%s1 + $0x30] sm:$0xff]
    %v38 = vld [vmem:[%s1 + $0x38] sm:$0xff]
    %v39 = vld [vmem:[%s1 + $0x40] sm:$0xff]
    %v40 = vld [vmem:[%s1 + $0x48] sm:$0xff]
    %v41 = vld [vmem:[%s1 + $0x50] sm:$0xff]
    %v42 = vld [vmem:[%s1 + $0x58] sm:$0xff]
    %v43 = vld [vmem:[%s1 + $0x60] sm:$0xff]
    %v44 = vld [vmem:[%s1 + $0x68] sm:$0xff]
    %v45 = vld [vmem:[%s1 + $0x70] sm:$0xff]
    %v46 = vld [vmem:[%s1 + $0x78] sm:$0xff]
    %47 = vmatprep.subr.mxu0 0.0
    %48 = vmatpush1.msra.mxu0 %v46
    %49 = vmatprep.subr.mxu0 0.0
    %50 = vmatpush1.msra.mxu0 %v45
    %51 = vmatprep.subr.mxu0 0.0
    %52 = vmatpush1.msra.mxu0 %v44
    %53 = vmatprep.subr.mxu0 0.0
    %54 = vmatpush1.msra.mxu0 %v43
    %55 = vmatprep.subr.mxu0 0.0
    %56 = vmatpush1.msra.mxu0 %v42
    %57 = vmatprep.subr.mxu0 0.0
    %58 = vmatpush1.msra.mxu0 %v41
    %59 = vmatprep.subr.mxu0 0.0
    %60 = vmatpush1.msra.mxu0 %v40
    %61 = vmatprep.subr.mxu0 0.0
    %62 = vmatpush1.msra.mxu0 %v39
    %63 = vmatprep.subr.mxu0 0.0
    %64 = vmatpush1.msra.mxu0 %v38
    %65 = vmatprep.subr.mxu0 0.0
    %66 = vmatpush1.msra.mxu0 %v37
    %67 = vmatprep.subr.mxu0 0.0
    %68 = vmatpush1.msra.mxu0 %v36
    %69 = vmatprep.subr.mxu0 0.0
    %70 = vmatpush1.msra.mxu0 %v35
    %71 = vmatprep.subr.mxu0 0.0
    %72 = vmatpush1.msra.mxu0 %v34
    %73 = vmatprep.subr.mxu0 0.0
    %74 = vmatpush1.msra.mxu0 %v33
    %75 = vmatprep.subr.mxu0 0.0
    %76 = vmatpush1.msra.mxu0 %v32
    %77 = vmatprep.subr.mxu0 0.0
    %78 = vmatpush1.msra.mxu0 %v31
    %79 = vmatprep.subr.mxu0 0.0
    %80 = vmatpush2.msra.mxu0 0.0
    %81 = vmatprep.subr.mxu0 0.0
    %82 = vmatpush2.msra.mxu0 0.0
    %83 = vmatprep.subr.mxu0 0.0
    %84 = vmatpush2.msra.mxu0 0.0
    %85 = vmatprep.subr.mxu0 0.0
    %86 = vmatpush2.msra.mxu0 0.0
    %87 = vmatprep.subr.mxu0 0.0
    %88 = vmatpush2.msra.mxu0 0.0
    %89 = vmatprep.subr.mxu0 0.0
    %90 = vmatpush2.msra.mxu0 0.0
    %91 = vmatprep.subr.mxu0 0.0
    %92 = vmatpush2.msra.mxu0 0.0
    %93 = vmatprep.subr.mxu0 0.0
    %94 = vmatpush2.msra.mxu0 0.0
    %95 = vmatprep.subr.mxu0 0.0
    %96 = vmatpush2.msra.mxu0 0.0
    %97 = vmatprep.subr.mxu0 0.0
    %98 = vmatpush2.msra.mxu0 0.0
    %99 = vmatprep.subr.mxu0 0.0
    %100 = vmatpush2.msra.mxu0 0.0
    %101 = vmatprep.subr.mxu0 0.0
    %102 = vmatpush2.msra.mxu0 0.0
    %103 = vmatprep.subr.mxu0 0.0
    %104 = vmatpush2.msra.mxu0 0.0
    %105 = vmatprep.subr.mxu0 0.0
    %106 = vmatpush2.msra.mxu0 0.0
    %107 = vmatprep.subr.mxu0 0.0
    %108 = vmatpush2.msra.mxu0 0.0
    %109 = vmatprep.subr.mxu0 0.0
    %110 = vmatpush2.msra.mxu0 0.0
    %111 = vmatprep.mubr.f32.mxu0 0.0
    %112 = vmatmul.mubr.f32.gmra.mxu0 %v29
    %v113 = vpop.f32.mrf.mxu0
    %v114 = vadd.f32 0.0, %v113
    %v115 = vpop.f32.mrf.mxu0
    %116 = vmatprep.mubr.f32.mxu0 0.0
    %117 = vmatmul.mubr.f32.gmra.mxu0 %v30
    %v118 = vpop.f32.mrf.mxu0
    %v119 = vadd.f32 0.0, %v118
    %v120 = vpop.f32.mrf.mxu0
    %121 = vdwg.mxu0
    %v122 = vld [vmem:[%s2] sm:$0xff]
    %v123 = vmul.f32 %v114, 11.313708
    %v124 = vmul.f32 %v119, 11.313708
    %v125 = vadd.f32 %v123, %v122
    %vm126 = vcmask 261120
    %127 = vst.msk [vmem:[#allocation2] sm:$0xff] %vm126, %v125
    %v128 = vadd.f32 %v124, %v122
    %s129 = scalar_lea.vmem [#allocation2], 8
    %130 = vst.msk [vmem:[%s129] sm:$0xff] %vm126, %v128
    // Predicated region
    $region14: #{tpu_custom_call.1} parent=1 // pred_check
      _
    $region15: #{tpu_custom_call.1} parent=1 // pred_check_branch
      %132 = sbr.rel (0) target = $region17
    $region16: #{tpu_custom_call.1} parent=1 // pred_region
      %s134 = ssub.s32 256, 256
      %135 = vsyncadd [#allocation3], %s134
      %s136 = sshll.u32 [#allocation2], 4
      %s137 = int_to_ptr.vmem [resolvable:$true] %s136
      %142 = dma.vmem_to_hbm [thread:$0]  %s137, 256, %s3, [#allocation3], 128, 128, 8
    $region17: #{tpu_custom_call.1} parent=1 // pred_fallthru
      _
    // Predicated region
    $region18: #{tpu_custom_call.1} parent=1 // pred_check
      _
    $region19: #{tpu_custom_call.1} parent=1 // pred_check_branch
      %144 = sbr.rel (0) target = $region21
    $region20: #{tpu_custom_call.1} parent=1 // pred_region
      %145 = dma.done [#allocation3], 256
    $region21: #{tpu_custom_call.1} parent=1 // pred_fallthru
      _
    %146 = vsyncpa [#allocation3], 1

// kernel: tpu_custom_call.1
$region0: #{tpu_custom_call.1}
  #allocation0 [shape = 'u32[]', space=smem, size = 0x4, offset = 0x4, fixed_abs, tag = 'smem constant byte address 0x4 - core index']
  #allocation1 [shape = 'u32[144,128]{1,0:T(1,128)}', space=vmem, size = 0x12000, scoped, tag = 'internal scratch']
  %s0 = inlined_call_operand.vmem [shape: s32[1,16,1], index: 0, kind: input, shape index: {}]
  %s1 = inlined_call_operand.vmem [shape: f32[128,32], index: 1, kind: input, shape index: {}]
  %s2 = inlined_call_operand.vmem [shape: f32[8,32], index: 2, kind: input, shape index: {}]
  %s3 = inlined_call_operand.hbm [shape: f32[2,8,32], index: 3, kind: output, shape index: {}]
  %s4 = sld [smem:[#allocation0]]
  $region22: #{tpu_custom_call.1} parent=0
    _
  %s6 = ssub.s32 1, %s4
  %s7 = scalar_select 0, %s6, %s4
  $region1: #{tpu_custom_call.1} parent=0
    #allocation2 [shape = 'u8[8192]{0}', space=vmem, size = 0x2000, scoped, tag = 'output window, operand 0, single buffered']
    #allocation3 [shape = 's32[1]{0}', space=sflag, size = 0x4, scoped, tag = 'scoped memory for tpu_custom_call.1']
    %8 = vsyncpa [#allocation3], 0
    // Predicated region
    $region2: #{tpu_custom_call.1} parent=1 // pred_check
      _
    $region3: #{tpu_custom_call.1} parent=1 // pred_check_branch
      %10 = sbr.rel (0) target = $region5
    $region4: #{tpu_custom_call.1} parent=1 // pred_region
      _
    $region5: #{tpu_custom_call.1} parent=1 // pred_fallthru
      _
    // Predicated region
    $region6: #{tpu_custom_call.1} parent=1 // pred_check
      _
    $region7: #{tpu_custom_call.1} parent=1 // pred_check_branch
      %12 = sbr.rel (0) target = $region9
    $region8: #{tpu_custom_call.1} parent=1 // pred_region
      _
    $region9: #{tpu_custom_call.1} parent=1 // pred_fallthru
      _
    // Predicated region
    $region10: #{tpu_custom_call.1} parent=1 // pred_check
      _
    $region11: #{tpu_custom_call.1} parent=1 // pred_check_branch
      %14 = sbr.rel (0) target = $region13
    $region12: #{tpu_custom_call.1} parent=1 // pred_region
      _
    $region13: #{tpu_custom_call.1} parent=1 // pred_fallthru
      _
    %v15 = vld [vmem:[%s0] sm:$0xff]
    %v16 = vld [vmem:[%s0 + $0x8] sm:$0xff]
    %v17 = vlaneseq
    %v18 = vand.u32 %v17, 127
    %19 = vset.pattern.permute.xlu0 0
    %20 = vperm.xlu0 %19, %v15
    %v21 = vpop.permute.xlu0 %20
    %22 = vset.pattern.permute.xlu0 0
    %23 = vperm.xlu0 %22, %v16
    %v24 = vpop.permute.xlu0 %23
    %vm25 = vcmp.eq.s32.totalorder %v21, %v18
    %vm26 = vcmp.eq.s32.totalorder %v24, %v18
    %v27 = vsel %vm25, 1, 0
    %v28 = vsel %vm26, 1, 0
    %v29 = vcvt.s32.f32 %v27
    %v30 = vcvt.s32.f32 %v28
    %v31 = vld [vmem:[%s1] sm:$0xff]
    %v32 = vld [vmem:[%s1 + $0x8] sm:$0xff]
    %v33 = vld [vmem:[%s1 + $0x10] sm:$0xff]
    %v34 = vld [vmem:[%s1 + $0x18] sm:$0xff]
    %v35 = vld [vmem:[%s1 + $0x20] sm:$0xff]
    %v36 = vld [vmem:[%s1 + $0x28] sm:$0xff]
    %v37 = vld [vmem:[%s1 + $0x30] sm:$0xff]
    %v38 = vld [vmem:[%s1 + $0x38] sm:$0xff]
    %v39 = vld [vmem:[%s1 + $0x40] sm:$0xff]
    %v40 = vld [vmem:[%s1 + $0x48] sm:$0xff]
    %v41 = vld [vmem:[%s1 + $0x50] sm:$0xff]
    %v42 = vld [vmem:[%s1 + $0x58] sm:$0xff]
    %v43 = vld [vmem:[%s1 + $0x60] sm:$0xff]
    %v44 = vld [vmem:[%s1 + $0x68] sm:$0xff]
    %v45 = vld [vmem:[%s1 + $0x70] sm:$0xff]
    %v46 = vld [vmem:[%s1 + $0x78] sm:$0xff]
    %47 = vmatprep.subr.mxu0 0.0
    %48 = vmatpush1.msra.mxu0 %v46
    %49 = vmatprep.subr.mxu0 0.0
    %50 = vmatpush1.msra.mxu0 %v45
    %51 = vmatprep.subr.mxu0 0.0
    %52 = vmatpush1.msra.mxu0 %v44
    %53 = vmatprep.subr.mxu0 0.0
    %54 = vmatpush1.msra.mxu0 %v43
    %55 = vmatprep.subr.mxu0 0.0
    %56 = vmatpush1.msra.mxu0 %v42
    %57 = vmatprep.subr.mxu0 0.0
    %58 = vmatpush1.msra.mxu0 %v41
    %59 = vmatprep.subr.mxu0 0.0
    %60 = vmatpush1.msra.mxu0 %v40
    %61 = vmatprep.subr.mxu0 0.0
    %62 = vmatpush1.msra.mxu0 %v39
    %63 = vmatprep.subr.mxu0 0.0
    %64 = vmatpush1.msra.mxu0 %v38
    %65 = vmatprep.subr.mxu0 0.0
    %66 = vmatpush1.msra.mxu0 %v37
    %67 = vmatprep.subr.mxu0 0.0
    %68 = vmatpush1.msra.mxu0 %v36
    %69 = vmatprep.subr.mxu0 0.0
    %70 = vmatpush1.msra.mxu0 %v35
    %71 = vmatprep.subr.mxu0 0.0
    %72 = vmatpush1.msra.mxu0 %v34
    %73 = vmatprep.subr.mxu0 0.0
    %74 = vmatpush1.msra.mxu0 %v33
    %75 = vmatprep.subr.mxu0 0.0
    %76 = vmatpush1.msra.mxu0 %v32
    %77 = vmatprep.subr.mxu0 0.0
    %78 = vmatpush1.msra.mxu0 %v31
    %79 = vmatprep.subr.mxu0 0.0
    %80 = vmatpush2.msra.mxu0 0.0
    %81 = vmatprep.subr.mxu0 0.0
    %82 = vmatpush2.msra.mxu0 0.0
    %83 = vmatprep.subr.mxu0 0.0
    %84 = vmatpush2.msra.mxu0 0.0
    %85 = vmatprep.subr.mxu0 0.0
    %86 = vmatpush2.msra.mxu0 0.0
    %87 = vmatprep.subr.mxu0 0.0
    %88 = vmatpush2.msra.mxu0 0.0
    %89 = vmatprep.subr.mxu0 0.0
    %90 = vmatpush2.msra.mxu0 0.0
    %91 = vmatprep.subr.mxu0 0.0
    %92 = vmatpush2.msra.mxu0 0.0
    %93 = vmatprep.subr.mxu0 0.0
    %94 = vmatpush2.msra.mxu0 0.0
    %95 = vmatprep.subr.mxu0 0.0
    %96 = vmatpush2.msra.mxu0 0.0
    %97 = vmatprep.subr.mxu0 0.0
    %98 = vmatpush2.msra.mxu0 0.0
    %99 = vmatprep.subr.mxu0 0.0
    %100 = vmatpush2.msra.mxu0 0.0
    %101 = vmatprep.subr.mxu0 0.0
    %102 = vmatpush2.msra.mxu0 0.0
    %103 = vmatprep.subr.mxu0 0.0
    %104 = vmatpush2.msra.mxu0 0.0
    %105 = vmatprep.subr.mxu0 0.0
    %106 = vmatpush2.msra.mxu0 0.0
    %107 = vmatprep.subr.mxu0 0.0
    %108 = vmatpush2.msra.mxu0 0.0
    %109 = vmatprep.subr.mxu0 0.0
    %110 = vmatpush2.msra.mxu0 0.0
    %111 = vmatprep.mubr.f32.mxu0 0.0
    %112 = vmatmul.mubr.f32.gmra.mxu0 %v29
    %v113 = vpop.f32.mrf.mxu0
    %v114 = vadd.f32 0.0, %v113
    %v115 = vpop.f32.mrf.mxu0
    %116 = vmatprep.mubr.f32.mxu0 0.0
    %117 = vmatmul.mubr.f32.gmra.mxu0 %v30
    %v118 = vpop.f32.mrf.mxu0
    %v119 = vadd.f32 0.0, %v118
    %v120 = vpop.f32.mrf.mxu0
    %121 = vdwg.mxu0
    %v122 = vld [vmem:[%s2] sm:$0xff]
    %v123 = vmul.f32 %v114, 11.313708
    %v124 = vmul.f32 %v119, 11.313708
    %v125 = vadd.f32 %v123, %v122
    %vm126 = vcmask 261120
    %127 = vst.msk [vmem:[#allocation2] sm:$0xff] %vm126, %v125
    %v128 = vadd.f32 %v124, %v122
    %s129 = scalar_lea.vmem [#allocation2], 8
    %130 = vst.msk [vmem:[%s129] sm:$0xff] %vm126, %v128
    // Predicated region
    $region14: #{tpu_custom_call.1} parent=1 // pred_check
      _
    $region15: #{tpu_custom_call.1} parent=1 // pred_check_branch
      %132 = sbr.rel (0) target = $region17
    $region16: #{tpu_custom_call.1} parent=1 // pred_region
      %s134 = ssub.s32 256, 256
      %135 = vsyncadd [#allocation3], %s134
      %s136 = sshll.u32 [#allocation2], 4
      %s137 = int_to_ptr.vmem [resolvable:$true] %s136
      %142 = dma.vmem_to_hbm [thread:$0]  %s137, 256, %s3, [#allocation3], 128, 128, 8
    $region17: #{tpu_custom_call.1} parent=1 // pred_fallthru
      _
    // Predicated region
    $region18: #{tpu_custom_call.1} parent=1 // pred_check
      _
    $region19: #{tpu_custom_call.1} parent=1 // pred_check_branch
      %144 = sbr.rel (0) target = $region21
    $region20: #{tpu_custom_call.1} parent=1 // pred_region
      %145 = dma.done [#allocation3], 256
    $region21: #{tpu_custom_call.1} parent=1 // pred_fallthru
      _
    %146 = vsyncpa [#allocation3], 1

</llo_original>
